<compile_context>
chip_gen: v5e
topology: v5e:2x2
jax: 0.10.0
libtpu: 0.0.40
codegen_flags: <defaults>
</compile_context>

<pallas_src>
import jax
import jax.numpy as jnp
from jax.experimental import pallas as pl
from jax.experimental.pallas import tpu as pltpu


# --------------------------------------------------------------------------
# Kernel: all 5 matmuls + 4 tanh for one (block_b, 128)-padded batch tile.
# --------------------------------------------------------------------------
def mlp_kernel(x_ref,
               w1_ref, b1_ref,
               w2_ref, b2_ref,
               w3_ref, b3_ref,
               w4_ref, b4_ref,
               w5_ref, b5_ref,
               o_ref):
    def layer(h, w_ref, b_ref, activate):
        w = w_ref[...]
        acc = jnp.dot(h.astype(w.dtype), w,
                      preferred_element_type=jnp.float32) + b_ref[...]
        return jnp.tanh(acc) if activate else acc

    h = x_ref[...]
    h = layer(h, w1_ref, b1_ref, True)
    h = layer(h, w2_ref, b2_ref, True)
    h = layer(h, w3_ref, b3_ref, True)
    h = layer(h, w4_ref, b4_ref, True)
    o_ref[...] = layer(h, w5_ref, b5_ref, False).astype(o_ref.dtype)


# --------------------------------------------------------------------------
# Wrapper
# --------------------------------------------------------------------------
def _round_up(n, m):
    return ((n + m - 1) // m) * m


def _pad2(a, rows, cols):
    pr, pc = rows - a.shape[0], cols - a.shape[1]
    if pr == 0 and pc == 0:
        return a
    return jnp.pad(a, ((0, pr), (0, pc)))


def mlp_forward(x, params, *, block_b=None, matmul_dtype=jnp.float32):
    """x: (B, input_size) float32.
    params: list of (w, b) with w (in_features, out_features) == torch weight.T,
            b (1, out_features).  Returns (B, out_features) float32.
    """
    B, in_features = x.shape
    out_dims = [w.shape[1] for (w, _) in params]          # [256, 128, 64, 32, 1]

    # Pad feature dims up to multiples of 128 (lane-dense activations / output).
    pdims = [_round_up(in_features, 128)] + [_round_up(d, 128) for d in out_dims]
    in_pad, out_pad = pdims[0], pdims[-1]

    padded = []
    for i, (w, b) in enumerate(params):
        wp = _pad2(w, pdims[i], pdims[i + 1]).astype(matmul_dtype)
        bp = _pad2(b, 1, pdims[i + 1]).astype(jnp.float32)
        padded.append((wp, bp))

    # Batch tile: multiple of 8, capped at 1024 rows. Pad batch to a multiple.
    if block_b is None:
        block_b = min(_round_up(B, 8), 1024)
    assert block_b % 8 == 0, "block_b must be a multiple of 8"
    B_pad = _round_up(B, block_b)

    x_p = x.astype(jnp.float32)
    if B_pad != B or in_pad != in_features:
        x_p = jnp.pad(x_p, ((0, B_pad - B), (0, in_pad - in_features)))

    in_specs = [pl.BlockSpec((block_b, in_pad), lambda i: (i, 0))]
    flat_params = []
    for w, b in padded:
        # Whole (grid-invariant) parameter resident in VMEM for every batch tile.
        in_specs.append(pl.BlockSpec(w.shape, lambda i: (0, 0)))
        in_specs.append(pl.BlockSpec(b.shape, lambda i: (0, 0)))
        flat_params.extend((w, b))

    # Lane-dense output block: (block_b, 128) -> unmasked vector stores.
    out_spec = pl.BlockSpec((block_b, out_pad), lambda i: (i, 0))

    out_padded = pl.pallas_call(
        mlp_kernel,
        out_shape=jax.ShapeDtypeStruct((B_pad, out_pad), jnp.float32),
        grid_spec=pltpu.PrefetchScalarGridSpec(
            num_scalar_prefetch=0,
            grid=(B_pad // block_b,),
            in_specs=in_specs,
            out_specs=out_spec,
        ),
        compiler_params=pltpu.CompilerParams(
            dimension_semantics=("parallel",)),
    )(x_p, *flat_params)

    # Strip padded rows / zero-padded lanes (real out_features = out_dims[-1]).
    return out_padded[:B, :out_dims[-1]]


# --------------------------------------------------------------------------
# Init mirroring torch.nn.Linear default: U(-1/sqrt(fan_in), 1/sqrt(fan_in))
# --------------------------------------------------------------------------
def init_linear(key, fan_in, fan_out):
    kw, kb = jax.random.split(key)
    bound = 1.0 / jnp.sqrt(float(fan_in))
    w = jax.random.uniform(kw, (fan_in, fan_out), jnp.float32, -bound, bound)
    b = jax.random.uniform(kb, (1, fan_out), jnp.float32, -bound, bound)
    return w, b


if __name__ == "__main__":
    key = jax.random.PRNGKey(0)
    input_size = 64     # MLP(input_size, hidden_size); hidden_size unused by forward
    batch = 8

    dims = [input_size, 256, 128, 64, 32, 1]
    keys = jax.random.split(key, len(dims))   # keys[0] for x, keys[1..5] for layers
    x = jax.random.normal(keys[0], (batch, input_size), jnp.float32)

    params = [init_linear(keys[li + 1], dims[li], dims[li + 1]) for li in range(5)]

    out = mlp_forward(x, params)              # f32 path (exact vs. reference)
    out = jax.block_until_ready(out)

    # Reference check in plain JAX (same math, same params, unpadded).
    ref = x
    for i, (w, b) in enumerate(params):
        ref = ref @ w + b
        if i < 4:
            ref = jnp.tanh(ref)

    assert out.shape == (batch, 1)
    assert jnp.allclose(out, ref, atol=1e-5, rtol=1e-5)

    print("KERNEL_OK")
</pallas_src>

<mosaic_0001>
module attributes {stable_mosaic.version = 11 : i64} {
  func.func @mlp_kernel(%arg0: i32, %arg1: memref<8x128xf32, #tpu.memory_space<vmem>>, %arg2: memref<128x256xf32, #tpu.memory_space<vmem>>, %arg3: memref<1x256xf32, #tpu.memory_space<vmem>>, %arg4: memref<256x128xf32, #tpu.memory_space<vmem>>, %arg5: memref<1x128xf32, #tpu.memory_space<vmem>>, %arg6: memref<128x128xf32, #tpu.memory_space<vmem>>, %arg7: memref<1x128xf32, #tpu.memory_space<vmem>>, %arg8: memref<128x128xf32, #tpu.memory_space<vmem>>, %arg9: memref<1x128xf32, #tpu.memory_space<vmem>>, %arg10: memref<128x128xf32, #tpu.memory_space<vmem>>, %arg11: memref<1x128xf32, #tpu.memory_space<vmem>>, %arg12: memref<8x128xf32, #tpu.memory_space<vmem>>) attributes {dimension_semantics = [#tpu.dimension_semantics<parallel>], iteration_bounds = array<i64: 1>, scalar_prefetch = 0 : i64, scratch_operands = 0 : i64, tpu.core_type = #tpu.core_type<tc>, window_params = [{transform_indices = @transform_0, window_bounds = array<i64: 8, 128>}, {pipeline_mode = #tpu.pipeline_mode<synchronous>, transform_indices = @transform_1, window_bounds = array<i64: 128, 256>}, {pipeline_mode = #tpu.pipeline_mode<synchronous>, transform_indices = @transform_2, window_bounds = array<i64: 1, 256>}, {pipeline_mode = #tpu.pipeline_mode<synchronous>, transform_indices = @transform_3, window_bounds = array<i64: 256, 128>}, {pipeline_mode = #tpu.pipeline_mode<synchronous>, transform_indices = @transform_4, window_bounds = array<i64: 1, 128>}, {pipeline_mode = #tpu.pipeline_mode<synchronous>, transform_indices = @transform_5, window_bounds = array<i64: 128, 128>}, {pipeline_mode = #tpu.pipeline_mode<synchronous>, transform_indices = @transform_6, window_bounds = array<i64: 1, 128>}, {pipeline_mode = #tpu.pipeline_mode<synchronous>, transform_indices = @transform_7, window_bounds = array<i64: 128, 128>}, {pipeline_mode = #tpu.pipeline_mode<synchronous>, transform_indices = @transform_8, window_bounds = array<i64: 1, 128>}, {pipeline_mode = #tpu.pipeline_mode<synchronous>, transform_indices = @transform_9, window_bounds = array<i64: 128, 128>}, {pipeline_mode = #tpu.pipeline_mode<synchronous>, transform_indices = @transform_10, window_bounds = array<i64: 1, 128>}, {transform_indices = @transform_11, window_bounds = array<i64: 8, 128>}]} {
    %c0 = arith.constant 0 : index
    %c0_0 = arith.constant 0 : index
    %0 = vector.load %arg1[%c0, %c0_0] : memref<8x128xf32, #tpu.memory_space<vmem>>, vector<8x128xf32>
    %c0_1 = arith.constant 0 : index
    %c0_2 = arith.constant 0 : index
    %1 = vector.load %arg2[%c0_1, %c0_2] : memref<128x256xf32, #tpu.memory_space<vmem>>, vector<128x256xf32>
    %cst = arith.constant dense<0.000000e+00> : vector<8x256xf32>
    %2 = tpu.matmul %0, %1, %cst {dimension_numbers = #tpu.dot_dimension_numbers<[1], [0], [0], [1], [0, 0, 1, 1], [], []>} : vector<8x128xf32>, vector<128x256xf32>, vector<8x256xf32> -> vector<8x256xf32>
    %c0_3 = arith.constant 0 : index
    %c0_4 = arith.constant 0 : index
    %3 = vector.load %arg3[%c0_3, %c0_4] : memref<1x256xf32, #tpu.memory_space<vmem>>, vector<1x256xf32>
    %4 = vector.broadcast %3 : vector<1x256xf32> to vector<8x256xf32>
    %5 = arith.addf %2, %4 : vector<8x256xf32>
    %6 = math.tanh %5 : vector<8x256xf32>
    %c0_5 = arith.constant 0 : index
    %c0_6 = arith.constant 0 : index
    %7 = vector.load %arg4[%c0_5, %c0_6] : memref<256x128xf32, #tpu.memory_space<vmem>>, vector<256x128xf32>
    %cst_7 = arith.constant dense<0.000000e+00> : vector<8x128xf32>
    %8 = tpu.matmul %6, %7, %cst_7 {dimension_numbers = #tpu.dot_dimension_numbers<[1], [0], [0], [1], [0, 0, 1, 1], [], []>} : vector<8x256xf32>, vector<256x128xf32>, vector<8x128xf32> -> vector<8x128xf32>
    %c0_8 = arith.constant 0 : index
    %c0_9 = arith.constant 0 : index
    %9 = vector.load %arg5[%c0_8, %c0_9] : memref<1x128xf32, #tpu.memory_space<vmem>>, vector<1x128xf32>
    %10 = vector.broadcast %9 : vector<1x128xf32> to vector<8x128xf32>
    %11 = arith.addf %8, %10 : vector<8x128xf32>
    %12 = math.tanh %11 : vector<8x128xf32>
    %c0_10 = arith.constant 0 : index
    %c0_11 = arith.constant 0 : index
    %13 = vector.load %arg6[%c0_10, %c0_11] : memref<128x128xf32, #tpu.memory_space<vmem>>, vector<128x128xf32>
    %cst_12 = arith.constant dense<0.000000e+00> : vector<8x128xf32>
    %14 = tpu.matmul %12, %13, %cst_12 {dimension_numbers = #tpu.dot_dimension_numbers<[1], [0], [0], [1], [0, 0, 1, 1], [], []>} : vector<8x128xf32>, vector<128x128xf32>, vector<8x128xf32> -> vector<8x128xf32>
    %c0_13 = arith.constant 0 : index
    %c0_14 = arith.constant 0 : index
    %15 = vector.load %arg7[%c0_13, %c0_14] : memref<1x128xf32, #tpu.memory_space<vmem>>, vector<1x128xf32>
    %16 = vector.broadcast %15 : vector<1x128xf32> to vector<8x128xf32>
    %17 = arith.addf %14, %16 : vector<8x128xf32>
    %18 = math.tanh %17 : vector<8x128xf32>
    %c0_15 = arith.constant 0 : index
    %c0_16 = arith.constant 0 : index
    %19 = vector.load %arg8[%c0_15, %c0_16] : memref<128x128xf32, #tpu.memory_space<vmem>>, vector<128x128xf32>
    %cst_17 = arith.constant dense<0.000000e+00> : vector<8x128xf32>
    %20 = tpu.matmul %18, %19, %cst_17 {dimension_numbers = #tpu.dot_dimension_numbers<[1], [0], [0], [1], [0, 0, 1, 1], [], []>} : vector<8x128xf32>, vector<128x128xf32>, vector<8x128xf32> -> vector<8x128xf32>
    %c0_18 = arith.constant 0 : index
    %c0_19 = arith.constant 0 : index
    %21 = vector.load %arg9[%c0_18, %c0_19] : memref<1x128xf32, #tpu.memory_space<vmem>>, vector<1x128xf32>
    %22 = vector.broadcast %21 : vector<1x128xf32> to vector<8x128xf32>
    %23 = arith.addf %20, %22 : vector<8x128xf32>
    %24 = math.tanh %23 : vector<8x128xf32>
    %c0_20 = arith.constant 0 : index
    %c0_21 = arith.constant 0 : index
    %25 = vector.load %arg10[%c0_20, %c0_21] : memref<128x128xf32, #tpu.memory_space<vmem>>, vector<128x128xf32>
    %cst_22 = arith.constant dense<0.000000e+00> : vector<8x128xf32>
    %26 = tpu.matmul %24, %25, %cst_22 {dimension_numbers = #tpu.dot_dimension_numbers<[1], [0], [0], [1], [0, 0, 1, 1], [], []>} : vector<8x128xf32>, vector<128x128xf32>, vector<8x128xf32> -> vector<8x128xf32>
    %c0_23 = arith.constant 0 : index
    %c0_24 = arith.constant 0 : index
    %27 = vector.load %arg11[%c0_23, %c0_24] : memref<1x128xf32, #tpu.memory_space<vmem>>, vector<1x128xf32>
    %28 = vector.broadcast %27 : vector<1x128xf32> to vector<8x128xf32>
    %29 = arith.addf %26, %28 : vector<8x128xf32>
    %c0_25 = arith.constant 0 : index
    %c0_26 = arith.constant 0 : index
    %30 = vector.load %arg12[%c0_25, %c0_26] : memref<8x128xf32, #tpu.memory_space<vmem>>, vector<8x128xf32>
    tpu.vector_store %arg12[%c0_25, %c0_26], %29 {strides = array<i32>} : memref<8x128xf32, #tpu.memory_space<vmem>>, vector<8x128xf32>,
    return
  }
  func.func @transform_0(%arg0: i32) -> (i32, i32) {
    %c0_i32 = arith.constant 0 : i32
    %c0_i32_0 = arith.constant 0 : i32
    return %arg0, %c0_i32 : i32, i32
  }
  func.func @transform_1(%arg0: i32) -> (i32, i32) {
    %c0_i32 = arith.constant 0 : i32
    %c0_i32_0 = arith.constant 0 : i32
    %c0_i32_1 = arith.constant 0 : i32
    return %c0_i32, %c0_i32_0 : i32, i32
  }
  func.func @transform_2(%arg0: i32) -> (i32, i32) {
    %c0_i32 = arith.constant 0 : i32
    %c0_i32_0 = arith.constant 0 : i32
    %c0_i32_1 = arith.constant 0 : i32
    return %c0_i32, %c0_i32_0 : i32, i32
  }
  func.func @transform_3(%arg0: i32) -> (i32, i32) {
    %c0_i32 = arith.constant 0 : i32
    %c0_i32_0 = arith.constant 0 : i32
    %c0_i32_1 = arith.constant 0 : i32
    return %c0_i32, %c0_i32_0 : i32, i32
  }
  func.func @transform_4(%arg0: i32) -> (i32, i32) {
    %c0_i32 = arith.constant 0 : i32
    %c0_i32_0 = arith.constant 0 : i32
    %c0_i32_1 = arith.constant 0 : i32
    return %c0_i32, %c0_i32_0 : i32, i32
  }
  func.func @transform_5(%arg0: i32) -> (i32, i32) {
    %c0_i32 = arith.constant 0 : i32
    %c0_i32_0 = arith.constant 0 : i32
    %c0_i32_1 = arith.constant 0 : i32
    return %c0_i32, %c0_i32_0 : i32, i32
  }
  func.func @transform_6(%arg0: i32) -> (i32, i32) {
    %c0_i32 = arith.constant 0 : i32
    %c0_i32_0 = arith.constant 0 : i32
    %c0_i32_1 = arith.constant 0 : i32
    return %c0_i32, %c0_i32_0 : i32, i32
  }
  func.func @transform_7(%arg0: i32) -> (i32, i32) {
    %c0_i32 = arith.constant 0 : i32
    %c0_i32_0 = arith.constant 0 : i32
    %c0_i32_1 = arith.constant 0 : i32
    return %c0_i32, %c0_i32_0 : i32, i32
  }
  func.func @transform_8(%arg0: i32) -> (i32, i32) {
    %c0_i32 = arith.constant 0 : i32
    %c0_i32_0 = arith.constant 0 : i32
    %c0_i32_1 = arith.constant 0 : i32
    return %c0_i32, %c0_i32_0 : i32, i32
  }
  func.func @transform_9(%arg0: i32) -> (i32, i32) {
    %c0_i32 = arith.constant 0 : i32
    %c0_i32_0 = arith.constant 0 : i32
    %c0_i32_1 = arith.constant 0 : i32
    return %c0_i32, %c0_i32_0 : i32, i32
  }
  func.func @transform_10(%arg0: i32) -> (i32, i32) {
    %c0_i32 = arith.constant 0 : i32
    %c0_i32_0 = arith.constant 0 : i32
    %c0_i32_1 = arith.constant 0 : i32
    return %c0_i32, %c0_i32_0 : i32, i32
  }
  func.func @transform_11(%arg0: i32) -> (i32, i32) {
    %c0_i32 = arith.constant 0 : i32
    %c0_i32_0 = arith.constant 0 : i32
    return %arg0, %c0_i32 : i32, i32
  }
}

</mosaic_0001>

<llo_original>
// kernel: tpu_custom_call.1
$region0: #{tpu_custom_call.1}
  #allocation0 [shape = 'u32[]', space=smem, size = 0x4, offset = 0x4, fixed_abs, tag = 'smem constant byte address 0x4 - core index']
  #allocation1 [shape = 'u32[72,128]{1,0:T(1,128)}', space=vmem, size = 0x9000, scoped, tag = 'internal scratch']
  %s0 = inlined_call_operand.hbm [shape: f32[8,128], index: 0, kind: input, shape index: {}]
  %s1 = inlined_call_operand.hbm [shape: f32[128,256], index: 1, kind: input, shape index: {}]
  %s2 = inlined_call_operand.hbm [shape: f32[1,256], index: 2, kind: input, shape index: {}]
  %s3 = inlined_call_operand.hbm [shape: f32[256,128], index: 3, kind: input, shape index: {}]
  %s4 = inlined_call_operand.vmem [shape: f32[1,128], index: 4, kind: input, shape index: {}]
  %s5 = inlined_call_operand.hbm [shape: f32[128,128], index: 5, kind: input, shape index: {}]
  %s6 = inlined_call_operand.vmem [shape: f32[1,128], index: 6, kind: input, shape index: {}]
  %s7 = inlined_call_operand.hbm [shape: f32[128,128], index: 7, kind: input, shape index: {}]
  %s8 = inlined_call_operand.vmem [shape: f32[1,128], index: 8, kind: input, shape index: {}]
  %s9 = inlined_call_operand.hbm [shape: f32[128,128], index: 9, kind: input, shape index: {}]
  %s10 = inlined_call_operand.vmem [shape: f32[1,128], index: 10, kind: input, shape index: {}]
  %s11 = inlined_call_operand.hbm [shape: f32[8,128], index: 11, kind: output, shape index: {}]
  %s12 = sld [smem:[#allocation0]]
  $region82: #{tpu_custom_call.1} parent=0
    _
  %s14 = ssub.s32 1, %s12
  %s15 = scalar_select 0, %s14, %s12
  $region1: #{tpu_custom_call.1} parent=0
    #allocation2 [shape = 'u8[4096]{0}', space=vmem, size = 0x1000, scoped, tag = 'input window, operand 0, single buffered']
    #allocation3 [shape = 's32[1]{0}', space=sflag, size = 0x4, scoped, tag = 'scoped memory for tpu_custom_call.1']
    #allocation4 [shape = 's32[1]{0}', space=sflag, size = 0x4, scoped, tag = 'scoped memory for tpu_custom_call.1']
    #allocation5 [shape = 'u8[131072]{0}', space=vmem, size = 0x20000, scoped, tag = 'input window, operand 1, single buffered']
    #allocation6 [shape = 's32[1]{0}', space=sflag, size = 0x4, scoped, tag = 'scoped memory for tpu_custom_call.1']
    #allocation7 [shape = 'u8[1024]{0}', space=vmem, size = 0x400, scoped, tag = 'input window, operand 2, single buffered']
    #allocation8 [shape = 'u8[131072]{0}', space=vmem, size = 0x20000, scoped, tag = 'input window, operand 3, single buffered']
    #allocation9 [shape = 's32[1]{0}', space=sflag, size = 0x4, scoped, tag = 'scoped memory for tpu_custom_call.1']
    #allocation10 [shape = 'u8[65536]{0}', space=vmem, size = 0x10000, scoped, tag = 'input window, operand 5, single buffered']
    #allocation11 [shape = 'u8[65536]{0}', space=vmem, size = 0x10000, scoped, tag = 'input window, operand 7, single buffered']
    #allocation12 [shape = 's32[1]{0}', space=sflag, size = 0x4, scoped, tag = 'scoped memory for tpu_custom_call.1']
    #allocation13 [shape = 'u8[65536]{0}', space=vmem, size = 0x10000, scoped, tag = 'input window, operand 9, single buffered']
    #allocation14 [shape = 'u8[4096]{0}', space=vmem, size = 0x1000, scoped, tag = 'output window, operand 0, single buffered']
    %16 = vsyncpa [#allocation3], 0
    %17 = vsyncpa [#allocation6], 0
    %18 = vsyncpa [#allocation9], 0
    %19 = vsyncpa [#allocation12], 0
    %20 = vsyncpa [#allocation4], 0
    // Predicated region
    $region2: #{tpu_custom_call.1} parent=1 // pred_check
      _
    $region3: #{tpu_custom_call.1} parent=1 // pred_check_branch
      %22 = sbr.rel (0) target = $region5
    $region4: #{tpu_custom_call.1} parent=1 // pred_region
      %24 = vsyncadd [#allocation3], 0
      %s26 = sshll.u32 %s0, 4
      %s27 = int_to_ptr.hbm [resolvable:$true] %s26
      %s28 = sshll.u32 [#allocation2], 4
      %s29 = int_to_ptr.vmem [resolvable:$true] %s28
      %31 = dma.hbm_to_vmem [thread:$0]  %s27, 128, %s29, [#allocation3]
    $region5: #{tpu_custom_call.1} parent=1 // pred_fallthru
      _
    // Predicated region
    $region6: #{tpu_custom_call.1} parent=1 // pred_check
      _
    $region7: #{tpu_custom_call.1} parent=1 // pred_check_branch
      %33 = sbr.rel (0) target = $region9
    $region8: #{tpu_custom_call.1} parent=1 // pred_region
      %35 = vsyncadd [#allocation6], 0
      %s36 = sshll.u32 %s1, 4
      %s37 = int_to_ptr.hbm [resolvable:$true] %s36
      %s38 = sshll.u32 [#allocation5], 4
      %s39 = int_to_ptr.vmem [resolvable:$true] %s38
      %44 = dma.hbm_to_vmem [thread:$0]  %s37, 4096, %s39, [#allocation6], 256, 256, 16
    $region9: #{tpu_custom_call.1} parent=1 // pred_fallthru
      _
    // Predicated region
    $region10: #{tpu_custom_call.1} parent=1 // pred_check
      _
    $region11: #{tpu_custom_call.1} parent=1 // pred_check_branch
      %46 = sbr.rel (0) target = $region13
    $region12: #{tpu_custom_call.1} parent=1 // pred_region
      %48 = vsyncadd [#allocation6], 0
      %s50 = sshll.u32 %s2, 4
      %s51 = int_to_ptr.hbm [resolvable:$true] %s50
      %s52 = sshll.u32 [#allocation7], 4
      %s53 = int_to_ptr.vmem [resolvable:$true] %s52
      %55 = dma.hbm_to_vmem [thread:$0]  %s51, 32, %s53, [#allocation6]
    $region13: #{tpu_custom_call.1} parent=1 // pred_fallthru
      _
    // Predicated region
    $region14: #{tpu_custom_call.1} parent=1 // pred_check
      _
    $region15: #{tpu_custom_call.1} parent=1 // pred_check_branch
      %57 = sbr.rel (0) target = $region17
    $region16: #{tpu_custom_call.1} parent=1 // pred_region
      %59 = vsyncadd [#allocation9], 0
      %s60 = sshll.u32 %s3, 4
      %s61 = int_to_ptr.hbm [resolvable:$true] %s60
      %s62 = sshll.u32 [#allocation8], 4
      %s63 = int_to_ptr.vmem [resolvable:$true] %s62
      %68 = dma.hbm_to_vmem [thread:$0]  %s61, 4096, %s63, [#allocation9], 128, 128, 8
    $region17: #{tpu_custom_call.1} parent=1 // pred_fallthru
      _
    // Predicated region
    $region18: #{tpu_custom_call.1} parent=1 // pred_check
      _
    $region19: #{tpu_custom_call.1} parent=1 // pred_check_branch
      %70 = sbr.rel (0) target = $region21
    $region20: #{tpu_custom_call.1} parent=1 // pred_region
      _
    $region21: #{tpu_custom_call.1} parent=1 // pred_fallthru
      _
    // Predicated region
    $region22: #{tpu_custom_call.1} parent=1 // pred_check
      _
    $region23: #{tpu_custom_call.1} parent=1 // pred_check_branch
      %72 = sbr.rel (0) target = $region25
    $region24: #{tpu_custom_call.1} parent=1 // pred_region
      %74 = vsyncadd [#allocation9], 0
      %s75 = sshll.u32 %s5, 4
      %s76 = int_to_ptr.hbm [resolvable:$true] %s75
      %s77 = sshll.u32 [#allocation10], 4
      %s78 = int_to_ptr.vmem [resolvable:$true] %s77
      %83 = dma.hbm_to_vmem [thread:$0]  %s76, 2048, %s78, [#allocation9], 128, 128, 8
    $region25: #{tpu_custom_call.1} parent=1 // pred_fallthru
      _
    // Predicated region
    $region26: #{tpu_custom_call.1} parent=1 // pred_check
      _
    $region27: #{tpu_custom_call.1} parent=1 // pred_check_branch
      %85 = sbr.rel (0) target = $region29
    $region28: #{tpu_custom_call.1} parent=1 // pred_region
      _
    $region29: #{tpu_custom_call.1} parent=1 // pred_fallthru
      _
    // Predicated region
    $region30: #{tpu_custom_call.1} parent=1 // pred_check
      _
    $region31: #{tpu_custom_call.1} parent=1 // pred_check_branch
      %87 = sbr.rel (0) target = $region33
    $region32: #{tpu_custom_call.1} parent=1 // pred_region
      %89 = vsyncadd [#allocation12], 0
      %s90 = sshll.u32 %s7, 4
      %s91 = int_to_ptr.hbm [resolvable:$true] %s90
      %s92 = sshll.u32 [#allocation11], 4
      %s93 = int_to_ptr.vmem [resolvable:$true] %s92
      %98 = dma.hbm_to_vmem [thread:$0]  %s91, 2048, %s93, [#allocation12], 128, 128, 8
    $region33: #{tpu_custom_call.1} parent=1 // pred_fallthru
      _
    // Predicated region
    $region34: #{tpu_custom_call.1} parent=1 // pred_check
      _
    $region35: #{tpu_custom_call.1} parent=1 // pred_check_branch
      %100 = sbr.rel (0) target = $region37
    $region36: #{tpu_custom_call.1} parent=1 // pred_region
      _
    $region37: #{tpu_custom_call.1} parent=1 // pred_fallthru
      _
    // Predicated region
    $region38: #{tpu_custom_call.1} parent=1 // pred_check
      _
    $region39: #{tpu_custom_call.1} parent=1 // pred_check_branch
      %102 = sbr.rel (0) target = $region41
    $region40: #{tpu_custom_call.1} parent=1 // pred_region
      %104 = vsyncadd [#allocation12], 0
      %s105 = sshll.u32 %s9, 4
      %s106 = int_to_ptr.hbm [resolvable:$true] %s105
      %s107 = sshll.u32 [#allocation13], 4
      %s108 = int_to_ptr.vmem [resolvable:$true] %s107
      %113 = dma.hbm_to_vmem [thread:$0]  %s106, 2048, %s108, [#allocation12], 128, 128, 8
    $region41: #{tpu_custom_call.1} parent=1 // pred_fallthru
      _
    // Predicated region
    $region42: #{tpu_custom_call.1} parent=1 // pred_check
      _
    $region43: #{tpu_custom_call.1} parent=1 // pred_check_branch
      %115 = sbr.rel (0) target = $region45
    $region44: #{tpu_custom_call.1} parent=1 // pred_region
      _
    $region45: #{tpu_custom_call.1} parent=1 // pred_fallthru
      _
    // Predicated region
    $region46: #{tpu_custom_call.1} parent=1 // pred_check
      _
    $region47: #{tpu_custom_call.1} parent=1 // pred_check_branch
      %117 = sbr.rel (0) target = $region49
    $region48: #{tpu_custom_call.1} parent=1 // pred_region
      %119 = dma.done [#allocation3], 128
    $region49: #{tpu_custom_call.1} parent=1 // pred_fallthru
      _
    // Predicated region
    $region50: #{tpu_custom_call.1} parent=1 // pred_check
      _
    $region51: #{tpu_custom_call.1} parent=1 // pred_check_branch
      %121 = sbr.rel (0) target = $region53
    $region52: #{tpu_custom_call.1} parent=1 // pred_region
      %123 = dma.done [#allocation6], 4096
    $region53: #{tpu_custom_call.1} parent=1 // pred_fallthru
      _
    // Predicated region
    $region54: #{tpu_custom_call.1} parent=1 // pred_check
      _
    $region55: #{tpu_custom_call.1} parent=1 // pred_check_branch
      %125 = sbr.rel (0) target = $region57
    $region56: #{tpu_custom_call.1} parent=1 // pred_region
      %127 = dma.done [#allocation6], 32
    $region57: #{tpu_custom_call.1} parent=1 // pred_fallthru
      _
    // Predicated region
    $region58: #{tpu_custom_call.1} parent=1 // pred_check
      _
    $region59: #{tpu_custom_call.1} parent=1 // pred_check_branch
      %129 = sbr.rel (0) target = $region61
    $region60: #{tpu_custom_call.1} parent=1 // pred_region
      %131 = dma.done [#allocation9], 4096
    $region61: #{tpu_custom_call.1} parent=1 // pred_fallthru
      _
    // Predicated region
    $region62: #{tpu_custom_call.1} parent=1 // pred_check
      _
    $region63: #{tpu_custom_call.1} parent=1 // pred_check_branch
      %133 = sbr.rel (0) target = $region65
    $region64: #{tpu_custom_call.1} parent=1 // pred_region
      %135 = dma.done [#allocation9], 2048
    $region65: #{tpu_custom_call.1} parent=1 // pred_fallthru
      _
    // Predicated region
    $region66: #{tpu_custom_call.1} parent=1 // pred_check
      _
    $region67: #{tpu_custom_call.1} parent=1 // pred_check_branch
      %137 = sbr.rel (0) target = $region69
    $region68: #{tpu_custom_call.1} parent=1 // pred_region
      %139 = dma.done [#allocation12], 2048
    $region69: #{tpu_custom_call.1} parent=1 // pred_fallthru
      _
    // Predicated region
    $region70: #{tpu_custom_call.1} parent=1 // pred_check
      _
    $region71: #{tpu_custom_call.1} parent=1 // pred_check_branch
      %141 = sbr.rel (0) target = $region73
    $region72: #{tpu_custom_call.1} parent=1 // pred_region
      %143 = dma.done [#allocation12], 2048
    $region73: #{tpu_custom_call.1} parent=1 // pred_fallthru
      _
    %v144 = vld [vmem:[#allocation2] sm:$0xff]
    %v145 = vld [vmem:[#allocation5] sm:$0xff]
    %v146 = vld [vmem:[#allocation5 + $0x8] sm:$0xff]
    %v147 = vld [vmem:[#allocation5 + $0x10] sm:$0xff]
    %v148 = vld [vmem:[#allocation5 + $0x18] sm:$0xff]
    %v149 = vld [vmem:[#allocation5 + $0x20] sm:$0xff]
    %v150 = vld [vmem:[#allocation5 + $0x28] sm:$0xff]
    %v151 = vld [vmem:[#allocation5 + $0x30] sm:$0xff]
    %v152 = vld [vmem:[#allocation5 + $0x38] sm:$0xff]
    %v153 = vld [vmem:[#allocation5 + $0x40] sm:$0xff]
    %v154 = vld [vmem:[#allocation5 + $0x48] sm:$0xff]
    %v155 = vld [vmem:[#allocation5 + $0x50] sm:$0xff]
    %v156 = vld [vmem:[#allocation5 + $0x58] sm:$0xff]
    %v157 = vld [vmem:[#allocation5 + $0x60] sm:$0xff]
    %v158 = vld [vmem:[#allocation5 + $0x68] sm:$0xff]
    %v159 = vld [vmem:[#allocation5 + $0x70] sm:$0xff]
    %v160 = vld [vmem:[#allocation5 + $0x78] sm:$0xff]
    %v161 = vld [vmem:[#allocation5 + $0x80] sm:$0xff]
    %v162 = vld [vmem:[#allocation5 + $0x88] sm:$0xff]
    %v163 = vld [vmem:[#allocation5 + $0x90] sm:$0xff]
    %v164 = vld [vmem:[#allocation5 + $0x98] sm:$0xff]
    %v165 = vld [vmem:[#allocation5 + $0xa0] sm:$0xff]
    %v166 = vld [vmem:[#allocation5 + $0xa8] sm:$0xff]
    %v167 = vld [vmem:[#allocation5 + $0xb0] sm:$0xff]
    %v168 = vld [vmem:[#allocation5 + $0xb8] sm:$0xff]
    %v169 = vld [vmem:[#allocation5 + $0xc0] sm:$0xff]
    %v170 = vld [vmem:[#allocation5 + $0xc8] sm:$0xff]
    %v171 = vld [vmem:[#allocation5 + $0xd0] sm:$0xff]
    %v172 = vld [vmem:[#allocation5 + $0xd8] sm:$0xff]
    %v173 = vld [vmem:[#allocation5 + $0xe0] sm:$0xff]
    %v174 = vld [vmem:[#allocation5 + $0xe8] sm:$0xff]
    %v175 = vld [vmem:[#allocation5 + $0xf0] sm:$0xff]
    %v176 = vld [vmem:[#allocation5 + $0xf8] sm:$0xff]
    %v177 = vld [vmem:[#allocation7] sm:$0x3]
    %v179 = vperm.slane %v177, 0
    %v180 = vperm.slane %v177, 1
    %183 = vmatpush.msra.mxu0 %v175
    %184 = vmatpush.msra.mxu0 %v173
    %185 = vmatpush.msra.mxu0 %v171
    %186 = vmatpush.msra.mxu0 %v169
    %187 = vmatpush.msra.mxu0 %v167
    %188 = vmatpush.msra.mxu0 %v165
    %189 = vmatpush.msra.mxu0 %v163
    %190 = vmatpush.msra.mxu0 %v161
    %191 = vmatpush.msra.mxu0 %v159
    %192 = vmatpush.msra.mxu0 %v157
    %193 = vmatpush.msra.mxu0 %v155
    %194 = vmatpush.msra.mxu0 %v153
    %195 = vmatpush.msra.mxu0 %v151
    %196 = vmatpush.msra.mxu0 %v149
    %197 = vmatpush.msra.mxu0 %v147
    %198 = vmatpush.msra.mxu0 %v145
    %199 = vmatmul.f32.gmra.mxu0 %v144
    %v200 = vpop.f32.mrf.mxu0
    %v201 = vadd.f32 %v179, %v200
    %202 = vdwg.mxu0
    %203 = vmatpush.msra.mxu0 %v176
    %204 = vmatpush.msra.mxu0 %v174
    %205 = vmatpush.msra.mxu0 %v172
    %206 = vmatpush.msra.mxu0 %v170
    %207 = vmatpush.msra.mxu0 %v168
    %208 = vmatpush.msra.mxu0 %v166
    %209 = vmatpush.msra.mxu0 %v164
    %210 = vmatpush.msra.mxu0 %v162
    %211 = vmatpush.msra.mxu0 %v160
    %212 = vmatpush.msra.mxu0 %v158
    %213 = vmatpush.msra.mxu0 %v156
    %214 = vmatpush.msra.mxu0 %v154
    %215 = vmatpush.msra.mxu0 %v152
    %216 = vmatpush.msra.mxu0 %v150
    %217 = vmatpush.msra.mxu0 %v148
    %218 = vmatpush.msra.mxu0 %v146
    %219 = vmatmul.f32.gmra.mxu0 %v144
    %v220 = vpop.f32.mrf.mxu0
    %v221 = vadd.f32 %v180, %v220
    %222 = vdwg.mxu0
    %v223 = vtanh.pop %v201
    %v224 = vtanh.pop %v221
    %v225 = vld [vmem:[#allocation8] sm:$0xff]
    %v226 = vld [vmem:[#allocation8 + $0x8] sm:$0xff]
    %v227 = vld [vmem:[#allocation8 + $0x10] sm:$0xff]
    %v228 = vld [vmem:[#allocation8 + $0x18] sm:$0xff]
    %v229 = vld [vmem:[#allocation8 + $0x20] sm:$0xff]
    %v230 = vld [vmem:[#allocation8 + $0x28] sm:$0xff]
    %v231 = vld [vmem:[#allocation8 + $0x30] sm:$0xff]
    %v232 = vld [vmem:[#allocation8 + $0x38] sm:$0xff]
    %v233 = vld [vmem:[#allocation8 + $0x40] sm:$0xff]
    %v234 = vld [vmem:[#allocation8 + $0x48] sm:$0xff]
    %v235 = vld [vmem:[#allocation8 + $0x50] sm:$0xff]
    %v236 = vld [vmem:[#allocation8 + $0x58] sm:$0xff]
    %v237 = vld [vmem:[#allocation8 + $0x60] sm:$0xff]
    %v238 = vld [vmem:[#allocation8 + $0x68] sm:$0xff]
    %v239 = vld [vmem:[#allocation8 + $0x70] sm:$0xff]
    %v240 = vld [vmem:[#allocation8 + $0x78] sm:$0xff]
    %v241 = vld [vmem:[#allocation8 + $0x80] sm:$0xff]
    %v242 = vld [vmem:[#allocation8 + $0x88] sm:$0xff]
    %v243 = vld [vmem:[#allocation8 + $0x90] sm:$0xff]
    %v244 = vld [vmem:[#allocation8 + $0x98] sm:$0xff]
    %v245 = vld [vmem:[#allocation8 + $0xa0] sm:$0xff]
    %v246 = vld [vmem:[#allocation8 + $0xa8] sm:$0xff]
    %v247 = vld [vmem:[#allocation8 + $0xb0] sm:$0xff]
    %v248 = vld [vmem:[#allocation8 + $0xb8] sm:$0xff]
    %v249 = vld [vmem:[#allocation8 + $0xc0] sm:$0xff]
    %v250 = vld [vmem:[#allocation8 + $0xc8] sm:$0xff]
    %v251 = vld [vmem:[#allocation8 + $0xd0] sm:$0xff]
    %v252 = vld [vmem:[#allocation8 + $0xd8] sm:$0xff]
    %v253 = vld [vmem:[#allocation8 + $0xe0] sm:$0xff]
    %v254 = vld [vmem:[#allocation8 + $0xe8] sm:$0xff]
    %v255 = vld [vmem:[#allocation8 + $0xf0] sm:$0xff]
    %v256 = vld [vmem:[#allocation8 + $0xf8] sm:$0xff]
    %v257 = vld [vmem:[%s4] sm:$0x1]
    %v259 = vperm.slane %v257, 0
    %261 = vmatpush.msra.mxu0 %v240
    %262 = vmatpush.msra.mxu0 %v239
    %263 = vmatpush.msra.mxu0 %v238
    %264 = vmatpush.msra.mxu0 %v237
    %265 = vmatpush.msra.mxu0 %v236
    %266 = vmatpush.msra.mxu0 %v235
    %267 = vmatpush.msra.mxu0 %v234
    %268 = vmatpush.msra.mxu0 %v233
    %269 = vmatpush.msra.mxu0 %v232
    %270 = vmatpush.msra.mxu0 %v231
    %271 = vmatpush.msra.mxu0 %v230
    %272 = vmatpush.msra.mxu0 %v229
    %273 = vmatpush.msra.mxu0 %v228
    %274 = vmatpush.msra.mxu0 %v227
    %275 = vmatpush.msra.mxu0 %v226
    %276 = vmatpush.msra.mxu0 %v225
    %277 = vmatmul.f32.gmra.mxu0 %v223
    %v278 = vpop.f32.mrf.mxu0
    %v279 = vadd.f32 %v259, %v278
    %280 = vdwg.mxu0
    %281 = vmatpush.msra.mxu0 %v256
    %282 = vmatpush.msra.mxu0 %v255
    %283 = vmatpush.msra.mxu0 %v254
    %284 = vmatpush.msra.mxu0 %v253
    %285 = vmatpush.msra.mxu0 %v252
    %286 = vmatpush.msra.mxu0 %v251
    %287 = vmatpush.msra.mxu0 %v250
    %288 = vmatpush.msra.mxu0 %v249
    %289 = vmatpush.msra.mxu0 %v248
    %290 = vmatpush.msra.mxu0 %v247
    %291 = vmatpush.msra.mxu0 %v246
    %292 = vmatpush.msra.mxu0 %v245
    %293 = vmatpush.msra.mxu0 %v244
    %294 = vmatpush.msra.mxu0 %v243
    %295 = vmatpush.msra.mxu0 %v242
    %296 = vmatpush.msra.mxu0 %v241
    %297 = vmatmul.f32.gmra.mxu0 %v224
    %v298 = vpop.f32.mrf.mxu0
    %v299 = vadd.f32 %v279, %v298
    %300 = vdwg.mxu0
    %v301 = vtanh.pop %v299
    %v302 = vld [vmem:[#allocation10] sm:$0xff]
    %v303 = vld [vmem:[#allocation10 + $0x8] sm:$0xff]
    %v304 = vld [vmem:[#allocation10 + $0x10] sm:$0xff]
    %v305 = vld [vmem:[#allocation10 + $0x18] sm:$0xff]
    %v306 = vld [vmem:[#allocation10 + $0x20] sm:$0xff]
    %v307 = vld [vmem:[#allocation10 + $0x28] sm:$0xff]
    %v308 = vld [vmem:[#allocation10 + $0x30] sm:$0xff]
    %v309 = vld [vmem:[#allocation10 + $0x38] sm:$0xff]
    %v310 = vld [vmem:[#allocation10 + $0x40] sm:$0xff]
    %v311 = vld [vmem:[#allocation10 + $0x48] sm:$0xff]
    %v312 = vld [vmem:[#allocation10 + $0x50] sm:$0xff]
    %v313 = vld [vmem:[#allocation10 + $0x58] sm:$0xff]
    %v314 = vld [vmem:[#allocation10 + $0x60] sm:$0xff]
    %v315 = vld [vmem:[#allocation10 + $0x68] sm:$0xff]
    %v316 = vld [vmem:[#allocation10 + $0x70] sm:$0xff]
    %v317 = vld [vmem:[#allocation10 + $0x78] sm:$0xff]
    %v318 = vld [vmem:[%s6] sm:$0x1]
    %v320 = vperm.slane %v318, 0
    %322 = vmatpush.msra.mxu0 %v317
    %323 = vmatpush.msra.mxu0 %v316
    %324 = vmatpush.msra.mxu0 %v315
    %325 = vmatpush.msra.mxu0 %v314
    %326 = vmatpush.msra.mxu0 %v313
    %327 = vmatpush.msra.mxu0 %v312
    %328 = vmatpush.msra.mxu0 %v311
    %329 = vmatpush.msra.mxu0 %v310
    %330 = vmatpush.msra.mxu0 %v309
    %331 = vmatpush.msra.mxu0 %v308
    %332 = vmatpush.msra.mxu0 %v307
    %333 = vmatpush.msra.mxu0 %v306
    %334 = vmatpush.msra.mxu0 %v305
    %335 = vmatpush.msra.mxu0 %v304
    %336 = vmatpush.msra.mxu0 %v303
    %337 = vmatpush.msra.mxu0 %v302
    %338 = vmatmul.f32.gmra.mxu0 %v301
    %v339 = vpop.f32.mrf.mxu0
    %v340 = vadd.f32 %v320, %v339
    %341 = vdwg.mxu0
    %v342 = vtanh.pop %v340
    %v343 = vld [vmem:[#allocation11] sm:$0xff]
    %v344 = vld [vmem:[#allocation11 + $0x8] sm:$0xff]
    %v345 = vld [vmem:[#allocation11 + $0x10] sm:$0xff]
    %v346 = vld [vmem:[#allocation11 + $0x18] sm:$0xff]
    %v347 = vld [vmem:[#allocation11 + $0x20] sm:$0xff]
    %v348 = vld [vmem:[#allocation11 + $0x28] sm:$0xff]
    %v349 = vld [vmem:[#allocation11 + $0x30] sm:$0xff]
    %v350 = vld [vmem:[#allocation11 + $0x38] sm:$0xff]
    %v351 = vld [vmem:[#allocation11 + $0x40] sm:$0xff]
    %v352 = vld [vmem:[#allocation11 + $0x48] sm:$0xff]
    %v353 = vld [vmem:[#allocation11 + $0x50] sm:$0xff]
    %v354 = vld [vmem:[#allocation11 + $0x58] sm:$0xff]
    %v355 = vld [vmem:[#allocation11 + $0x60] sm:$0xff]
    %v356 = vld [vmem:[#allocation11 + $0x68] sm:$0xff]
    %v357 = vld [vmem:[#allocation11 + $0x70] sm:$0xff]
    %v358 = vld [vmem:[#allocation11 + $0x78] sm:$0xff]
    %v359 = vld [vmem:[%s8] sm:$0x1]
    %v361 = vperm.slane %v359, 0
    %363 = vmatpush.msra.mxu0 %v358
    %364 = vmatpush.msra.mxu0 %v357
    %365 = vmatpush.msra.mxu0 %v356
    %366 = vmatpush.msra.mxu0 %v355
    %367 = vmatpush.msra.mxu0 %v354
    %368 = vmatpush.msra.mxu0 %v353
    %369 = vmatpush.msra.mxu0 %v352
    %370 = vmatpush.msra.mxu0 %v351
    %371 = vmatpush.msra.mxu0 %v350
    %372 = vmatpush.msra.mxu0 %v349
    %373 = vmatpush.msra.mxu0 %v348
    %374 = vmatpush.msra.mxu0 %v347
    %375 = vmatpush.msra.mxu0 %v346
    %376 = vmatpush.msra.mxu0 %v345
    %377 = vmatpush.msra.mxu0 %v344
    %378 = vmatpush.msra.mxu0 %v343
    %379 = vmatmul.f32.gmra.mxu0 %v342
    %v380 = vpop.f32.mrf.mxu0
    %v381 = vadd.f32 %v361, %v380
    %382 = vdwg.mxu0
    %v383 = vtanh.pop %v381
    %v384 = vld [vmem:[#allocation13] sm:$0xff]
    %v385 = vld [vmem:[#allocation13 + $0x8] sm:$0xff]
    %v386 = vld [vmem:[#allocation13 + $0x10] sm:$0xff]
    %v387 = vld [vmem:[#allocation13 + $0x18] sm:$0xff]
    %v388 = vld [vmem:[#allocation13 + $0x20] sm:$0xff]
    %v389 = vld [vmem:[#allocation13 + $0x28] sm:$0xff]
    %v390 = vld [vmem:[#allocation13 + $0x30] sm:$0xff]
    %v391 = vld [vmem:[#allocation13 + $0x38] sm:$0xff]
    %v392 = vld [vmem:[#allocation13 + $0x40] sm:$0xff]
    %v393 = vld [vmem:[#allocation13 + $0x48] sm:$0xff]
    %v394 = vld [vmem:[#allocation13 + $0x50] sm:$0xff]
    %v395 = vld [vmem:[#allocation13 + $0x58] sm:$0xff]
    %v396 = vld [vmem:[#allocation13 + $0x60] sm:$0xff]
    %v397 = vld [vmem:[#allocation13 + $0x68] sm:$0xff]
    %v398 = vld [vmem:[#allocation13 + $0x70] sm:$0xff]
    %v399 = vld [vmem:[#allocation13 + $0x78] sm:$0xff]
    %v400 = vld [vmem:[%s10] sm:$0x1]
    %v402 = vperm.slane %v400, 0
    %404 = vmatpush.msra.mxu0 %v399
    %405 = vmatpush.msra.mxu0 %v398
    %406 = vmatpush.msra.mxu0 %v397
    %407 = vmatpush.msra.mxu0 %v396
    %408 = vmatpush.msra.mxu0 %v395
    %409 = vmatpush.msra.mxu0 %v394
    %410 = vmatpush.msra.mxu0 %v393
    %411 = vmatpush.msra.mxu0 %v392
    %412 = vmatpush.msra.mxu0 %v391
    %413 = vmatpush.msra.mxu0 %v390
    %414 = vmatpush.msra.mxu0 %v389
    %415 = vmatpush.msra.mxu0 %v388
    %416 = vmatpush.msra.mxu0 %v387
    %417 = vmatpush.msra.mxu0 %v386
    %418 = vmatpush.msra.mxu0 %v385
    %419 = vmatpush.msra.mxu0 %v384
    %420 = vmatmul.f32.gmra.mxu0 %v383
    %v421 = vpop.f32.mrf.mxu0
    %v422 = vadd.f32 %v402, %v421
    %423 = vdwg.mxu0
    %424 = vst [vmem:[#allocation14] sm:$0xff] %v422
    // Predicated region
    $region74: #{tpu_custom_call.1} parent=1 // pred_check
      _
    $region75: #{tpu_custom_call.1} parent=1 // pred_check_branch
      %426 = sbr.rel (0) target = $region77
    $region76: #{tpu_custom_call.1} parent=1 // pred_region
      %428 = vsyncadd [#allocation4], 0
      %s430 = sshll.u32 [#allocation14], 4
      %s431 = int_to_ptr.vmem [resolvable:$true] %s430
      %s432 = sshll.u32 %s11, 4
      %s433 = int_to_ptr.hbm [resolvable:$true] %s432
      %435 = dma.vmem_to_hbm [thread:$0]  %s431, 128, %s433, [#allocation4]
    $region77: #{tpu_custom_call.1} parent=1 // pred_fallthru
      _
    // Predicated region
    $region78: #{tpu_custom_call.1} parent=1 // pred_check
      _
    $region79: #{tpu_custom_call.1} parent=1 // pred_check_branch
      %437 = sbr.rel (0) target = $region81
    $region80: #{tpu_custom_call.1} parent=1 // pred_region
      %439 = dma.done [#allocation4], 128
    $region81: #{tpu_custom_call.1} parent=1 // pred_fallthru
      _
    %440 = vsyncpa [#allocation3], 1
    %441 = vsyncpa [#allocation6], 1
    %442 = vsyncpa [#allocation9], 1
    %443 = vsyncpa [#allocation12], 1
    %444 = vsyncpa [#allocation4], 1

</llo_original>
